<compile_context>
chip_gen: v6e
topology: v6e:2x2x1
jax: 0.10.0
libtpu: 0.0.40
codegen_flags: <defaults>
</compile_context>

<pallas_src>
import functools

import jax
import jax.numpy as jnp
from jax import lax
from jax.experimental import pallas as pl
from jax.experimental.pallas import tpu as pltpu

_LANE = 128
_SUBLANE = 8


def _count_loss_kernel(fp_ref, fn_ref, o_ref, *, m2, tm, tiles_per_core,
                       num_tiles, tail_rows, has_partial_tail, has_dup):
    c = pl.program_id(0)   # megacore split axis ("parallel")
    t = pl.program_id(1)   # reduction axis ("arbitrary"); output block resident

    @pl.when(t == 0)
    def _():
        o_ref[...] = jnp.zeros_like(o_ref)

    diff = fn_ref[...].astype(jnp.float32) - fp_ref[...].astype(jnp.float32) + m2
    val = jnp.maximum(diff, 0.0)

    def acc(v):
        # (tm, 128) -> (tm//8, 8, 128): sum over the leading axis is plain vreg
        # adds on the VPU; accumulate into the resident output block.
        o_ref[...] += v.reshape(tm // _SUBLANE, _SUBLANE, _LANE).sum(
            axis=0, keepdims=True)

    if not has_partial_tail and not has_dup:
        # Hot path: every tile is fully valid -> no masks, no scalar guards.
        acc(val)
    else:
        tile_idx = c * tiles_per_core + t
        full_limit = num_tiles - 1 if has_partial_tail else num_tiles

        @pl.when(tile_idx < full_limit)
        def _():
            acc(val)

        if has_partial_tail:
            # Cold path: executes for exactly one grid step at runtime.
            @pl.when(tile_idx == num_tiles - 1)
            def _():
                row = lax.broadcasted_iota(jnp.int32, (tm, _LANE), 0)
                acc(jnp.where(row < tail_rows, val, 0.0))
        # Duplicated (over-covering) tiles: tile_idx >= num_tiles -> no branch
        # fires, nothing accumulated (the single wasted fetch is <= one tile).


def _round_up(x, m):
    return ((x + m - 1) // m) * m


def count_loss(f_p, f_n, m2=1.0, tile_m=8192, min_pallas_elems=1 << 20):
    """mean(relu(f_n - f_p + m2)) computed with a Pallas TPU kernel."""
    assert f_p.shape == f_n.shape
    n_elems = int(f_p.size)

    # Tiny inputs: XLA fusion beats the pallas_call fixed launch/DMA cost.
    if n_elems < min_pallas_elems:
        d = f_n.astype(jnp.float32) - f_p.astype(jnp.float32) + jnp.float32(m2)
        return jnp.mean(jnp.maximum(d, 0.0))

    fp = f_p.reshape(-1)
    fn = f_n.reshape(-1)

    m_rows = pl.cdiv(n_elems, _LANE)

    # Row-tile size: default 8192 rows = 4 MiB / input / block (f32), big
    # enough to amortize per-step overhead; clamped (multiple of 16 so bf16
    # inputs also tile cleanly) for small inputs.
    tm = min(_round_up(tile_m, 16), _round_up(m_rows, 16))

    # Rows the kernel actually sees. For large inputs this equals m_rows
    # (zero-copy common case); for inputs smaller than one tile we pad up to tm
    # rows so the block never exceeds the array.
    rows = max(m_rows, tm)
    padded_elems = rows * _LANE
    if padded_elems != n_elems:
        # Rare path: one pad copy. f_n is padded with the most-negative finite
        # value so relu(f_n_pad - f_p_pad + m2) == 0 exactly -> no per-element
        # lane masking needed in the kernel.
        if jnp.issubdtype(fn.dtype, jnp.floating):
            sentinel = jnp.finfo(fn.dtype).min
        else:
            sentinel = jnp.iinfo(fn.dtype).min
        fp = jnp.pad(fp, (0, padded_elems - n_elems))
        fn = jnp.pad(fn, (0, padded_elems - n_elems), constant_values=sentinel)

    fp2 = fp.reshape(rows, _LANE)
    fn2 = fn.reshape(rows, _LANE)

    num_tiles = pl.cdiv(rows, tm)
    tail_rows = rows - (num_tiles - 1) * tm        # valid rows in the last tile
    has_partial_tail = tail_rows < tm              # last block overhangs array

    n_cores = 2 if num_tiles >= 2 else 1           # v7x megacore split
    tiles_per_core = pl.cdiv(num_tiles, n_cores)
    has_dup = n_cores * tiles_per_core > num_tiles  # at most one wasted fetch

    if has_dup:
        def in_map(c, t):
            # Clamp so the over-covering grid never produces an OOB block
            # index; the duplicated tile is skipped inside the kernel.
            return (jnp.minimum(c * tiles_per_core + t, num_tiles - 1), 0)
    else:
        def in_map(c, t):
            return (c * tiles_per_core + t, 0)

    kernel = functools.partial(
        _count_loss_kernel,
        m2=float(m2),
        tm=tm,
        tiles_per_core=tiles_per_core,
        num_tiles=num_tiles,
        tail_rows=tail_rows,
        has_partial_tail=has_partial_tail,
        has_dup=has_dup,
    )

    out_bytes = n_cores * _SUBLANE * _LANE * 4
    cost = pl.CostEstimate(
        flops=4 * n_elems,                 # sub + add + relu + accumulate
        transcendentals=0,
        bytes_accessed=int(fp2.nbytes) + int(fn2.nbytes) + out_bytes,
    )

    partials = pl.pallas_call(
        kernel,
        out_shape=jax.ShapeDtypeStruct((n_cores, _SUBLANE, _LANE), jnp.float32),
        grid_spec=pltpu.PrefetchScalarGridSpec(
            num_scalar_prefetch=0,
            grid=(n_cores, tiles_per_core),
            in_specs=[
                pl.BlockSpec((tm, _LANE), in_map),
                pl.BlockSpec((tm, _LANE), in_map),
            ],
            out_specs=pl.BlockSpec((1, _SUBLANE, _LANE), lambda c, t: (c, 0, 0)),
        ),
        compiler_params=pltpu.CompilerParams(
            dimension_semantics=("parallel", "arbitrary"),
            # 2 inputs x 2 pipeline buffers x 4 MiB (tm=8192, f32) = 16 MiB,
            # which exactly hits v5e's 16 MiB scoped-VMEM default; raise the
            # scoped limit (physical: 128 MiB v5e/v6e, 64 MiB v7x -> 48 MiB is
            # safe on every generation).
            vmem_limit_bytes=48 * 1024 * 1024,
        ),
        cost_estimate=cost,
    )(fp2, fn2)

    # Single tiny cross-lane reduce + normalization outside the kernel.
    return jnp.sum(partials) * jnp.float32(1.0 / n_elems)


if __name__ == "__main__":
    key = jax.random.PRNGKey(0)
    k1, k2, k3, k4 = jax.random.split(key, 4)

    # Shapes consistent with the training script's feature tensors (NCHW).
    f_p = jax.random.normal(k1, (2, 4, 16, 16), dtype=jnp.float32)
    f_n = jax.random.normal(k2, (2, 4, 16, 16), dtype=jnp.float32)

    # Force the Pallas path (production default short-circuits tiny inputs).
    loss = count_loss(f_p, f_n, m2=1.0, min_pallas_elems=0)
    jax.block_until_ready(loss)
    ref = jnp.mean(jnp.maximum(f_n - f_p + 1.0, 0.0))
    assert jnp.allclose(loss, ref, atol=1e-5, rtol=1e-5), (loss, ref)

    # Ragged element count (not a multiple of 128): exercises the sentinel-pad
    # path while staying small.
    g_p = jax.random.normal(k3, (3, 5, 17, 13), dtype=jnp.float32)
    g_n = jax.random.normal(k4, (3, 5, 17, 13), dtype=jnp.float32)
    loss2 = count_loss(g_p, g_n, m2=1.0, min_pallas_elems=0)
    jax.block_until_ready(loss2)
    ref2 = jnp.mean(jnp.maximum(g_n - g_p + 1.0, 0.0))
    assert jnp.allclose(loss2, ref2, atol=1e-5, rtol=1e-5), (loss2, ref2)

    print("KERNEL_OK")
</pallas_src>

<mosaic_0001>
module attributes {stable_mosaic.version = 11 : i64} {
  func.func @_count_loss_kernel(%arg0: i32, %arg1: i32, %arg2: memref<16x128xf32, #tpu.memory_space<vmem>>, %arg3: memref<16x128xf32, #tpu.memory_space<vmem>>, %arg4: memref<1x8x128xf32, #tpu.memory_space<vmem>>) attributes {dimension_semantics = [#tpu.dimension_semantics<parallel>, #tpu.dimension_semantics<arbitrary>], iteration_bounds = array<i64: 1, 1>, scalar_prefetch = 0 : i64, scratch_operands = 0 : i64, tpu.core_type = #tpu.core_type<tc>, window_params = [{transform_indices = @transform_0, window_bounds = array<i64: 16, 128>}, {transform_indices = @transform_1, window_bounds = array<i64: 16, 128>}, {transform_indices = @transform_2, window_bounds = array<i64: 1, 8, 128>}]} {
    %c0_i32 = arith.constant 0 : i32
    %0 = arith.cmpi eq, %arg1, %c0_i32 : i32
    %1 = arith.extui %0 : i1 to i32
    %c0_i32_0 = arith.constant 0 : i32
    %2 = arith.cmpi ne, %1, %c0_i32_0 : i32
    scf.if %2 {
      %cst_12 = arith.constant 0.000000e+00 : f32
      %16 = vector.broadcast %cst_12 : f32 to vector<1x8x128xf32>
      %c0_13 = arith.constant 0 : index
      %c0_14 = arith.constant 0 : index
      %c0_15 = arith.constant 0 : index
      %17 = vector.load %arg4[%c0_13, %c0_14, %c0_15] : memref<1x8x128xf32, #tpu.memory_space<vmem>>, vector<1x8x128xf32>
      tpu.vector_store %arg4[%c0_13, %c0_14, %c0_15], %16 {strides = array<i32>} : memref<1x8x128xf32, #tpu.memory_space<vmem>>, vector<1x8x128xf32>,
    } else {
    }
    %c0 = arith.constant 0 : index
    %c0_1 = arith.constant 0 : index
    %3 = vector.load %arg3[%c0, %c0_1] : memref<16x128xf32, #tpu.memory_space<vmem>>, vector<16x128xf32>
    %c0_2 = arith.constant 0 : index
    %c0_3 = arith.constant 0 : index
    %4 = vector.load %arg2[%c0_2, %c0_3] : memref<16x128xf32, #tpu.memory_space<vmem>>, vector<16x128xf32>
    %5 = arith.subf %3, %4 : vector<16x128xf32>
    %cst = arith.constant 1.000000e+00 : f32
    %6 = vector.broadcast %cst : f32 to vector<16x128xf32>
    %7 = arith.addf %5, %6 : vector<16x128xf32>
    %cst_4 = arith.constant 0.000000e+00 : f32
    %8 = vector.broadcast %cst_4 : f32 to vector<16x128xf32>
    %9 = arith.maximumf %7, %8 : vector<16x128xf32>
    %c0_5 = arith.constant 0 : index
    %c0_6 = arith.constant 0 : index
    %c0_7 = arith.constant 0 : index
    %10 = vector.load %arg4[%c0_5, %c0_6, %c0_7] : memref<1x8x128xf32, #tpu.memory_space<vmem>>, vector<1x8x128xf32>
    %11 = vector.shape_cast %9 : vector<16x128xf32> to vector<2x8x128xf32>
    %cst_8 = arith.constant dense<0.000000e+00> : vector<8x128xf32>
    %12 = vector.multi_reduction <add>, %11, %cst_8 [0] : vector<2x8x128xf32> to vector<8x128xf32>
    %13 = vector.shape_cast %12 : vector<8x128xf32> to vector<1x8x128xf32>
    %14 = arith.addf %10, %13 : vector<1x8x128xf32>
    %c0_9 = arith.constant 0 : index
    %c0_10 = arith.constant 0 : index
    %c0_11 = arith.constant 0 : index
    %15 = vector.load %arg4[%c0_9, %c0_10, %c0_11] : memref<1x8x128xf32, #tpu.memory_space<vmem>>, vector<1x8x128xf32>
    tpu.vector_store %arg4[%c0_9, %c0_10, %c0_11], %14 {strides = array<i32>} : memref<1x8x128xf32, #tpu.memory_space<vmem>>, vector<1x8x128xf32>,
    return
  }
  func.func @transform_0(%arg0: i32, %arg1: i32) -> (i32, i32) {
    %c1_i32 = arith.constant 1 : i32
    %0 = arith.muli %arg0, %c1_i32 : i32
    %1 = arith.addi %0, %arg1 : i32
    %c0_i32 = arith.constant 0 : i32
    %c0_i32_0 = arith.constant 0 : i32
    return %1, %c0_i32 : i32, i32
  }
  func.func @transform_1(%arg0: i32, %arg1: i32) -> (i32, i32) {
    %c1_i32 = arith.constant 1 : i32
    %0 = arith.muli %arg0, %c1_i32 : i32
    %1 = arith.addi %0, %arg1 : i32
    %c0_i32 = arith.constant 0 : i32
    %c0_i32_0 = arith.constant 0 : i32
    return %1, %c0_i32 : i32, i32
  }
  func.func @transform_2(%arg0: i32, %arg1: i32) -> (i32, i32, i32) {
    %c0_i32 = arith.constant 0 : i32
    %c0_i32_0 = arith.constant 0 : i32
    %c0_i32_1 = arith.constant 0 : i32
    return %arg0, %c0_i32, %c0_i32_0 : i32, i32, i32
  }
}

</mosaic_0001>

<llo_original>
// kernel: tpu_custom_call.1
$region0: #{tpu_custom_call.1}
  #allocation0 [shape = 'u32[]', space=smem, size = 0x4, offset = 0x4, fixed_abs, tag = 'smem constant byte address 0x4 - core index']
  #allocation1 [shape = 'u32[144,128]{1,0:T(1,128)}', space=vmem, size = 0x12000, scoped, tag = 'internal scratch']
  %s0 = inlined_call_operand.hbm [shape: f32[16,128], index: 0, kind: input, shape index: {}]
  %s1 = inlined_call_operand.hbm [shape: f32[16,128], index: 1, kind: input, shape index: {}]
  %s2 = inlined_call_operand.hbm [shape: f32[1,8,128], index: 2, kind: output, shape index: {}]
  %s3 = sld [smem:[#allocation0]]
  $region30: #{tpu_custom_call.1} parent=0
    _
  %s5 = ssub.s32 1, %s3
  %s6 = scalar_select 0, %s5, %s3
  $region1: #{tpu_custom_call.1} parent=0
    #allocation2 [shape = 'u8[8192]{0}', space=vmem, size = 0x2000, scoped, tag = 'input window, operand 0, single buffered']
    #allocation3 [shape = 's32[1]{0}', space=sflag, size = 0x4, scoped, tag = 'scoped memory for tpu_custom_call.1']
    #allocation4 [shape = 's32[1]{0}', space=sflag, size = 0x4, scoped, tag = 'scoped memory for tpu_custom_call.1']
    #allocation5 [shape = 'u8[8192]{0}', space=vmem, size = 0x2000, scoped, tag = 'input window, operand 1, single buffered']
    #allocation6 [shape = 's32[1]{0}', space=sflag, size = 0x4, scoped, tag = 'scoped memory for tpu_custom_call.1']
    #allocation7 [shape = 'u8[4096]{0}', space=vmem, size = 0x1000, scoped, tag = 'output window, operand 0, single buffered']
    %7 = vsyncpa [#allocation3], 0
    %8 = vsyncpa [#allocation6], 0
    %9 = vsyncpa [#allocation4], 0
    // Predicated region
    $region2: #{tpu_custom_call.1} parent=1 // pred_check
      _
    $region3: #{tpu_custom_call.1} parent=1 // pred_check_branch
      %11 = sbr.rel (0) target = $region5
    $region4: #{tpu_custom_call.1} parent=1 // pred_region
      %s12 = sadd.s32 0, 0
      %s13 = smul.u32 2, %s12
      %s15 = ssub.s32 256, 256
      %16 = vsyncadd [#allocation3], %s15
      %s17 = smul.addr %s13, 128
      %s18 = scalar_lea.hbm %s0, %s17
      %s19 = sshll.u32 [#allocation2], 4
      %s20 = int_to_ptr.vmem [resolvable:$true] %s19
      %25 = dma.hbm_to_vmem [thread:$0]  %s18, 256, %s20, [#allocation3], 128, 128, 8
    $region5: #{tpu_custom_call.1} parent=1 // pred_fallthru
      _
    // Predicated region
    $region6: #{tpu_custom_call.1} parent=1 // pred_check
      _
    $region7: #{tpu_custom_call.1} parent=1 // pred_check_branch
      %27 = sbr.rel (0) target = $region9
    $region8: #{tpu_custom_call.1} parent=1 // pred_region
      %s28 = sadd.s32 0, 0
      %s29 = smul.u32 2, %s28
      %s31 = ssub.s32 256, 256
      %32 = vsyncadd [#allocation6], %s31
      %s33 = smul.addr %s29, 128
      %s34 = scalar_lea.hbm %s1, %s33
      %s35 = sshll.u32 [#allocation5], 4
      %s36 = int_to_ptr.vmem [resolvable:$true] %s35
      %41 = dma.hbm_to_vmem [thread:$0]  %s34, 256, %s36, [#allocation6], 128, 128, 8
    $region9: #{tpu_custom_call.1} parent=1 // pred_fallthru
      _
    // Predicated region
    $region10: #{tpu_custom_call.1} parent=1 // pred_check
      _
    $region11: #{tpu_custom_call.1} parent=1 // pred_check_branch
      %43 = sbr.rel (0) target = $region13
    $region12: #{tpu_custom_call.1} parent=1 // pred_region
      %44 = dma.done [#allocation3], 256
    $region13: #{tpu_custom_call.1} parent=1 // pred_fallthru
      _
    // Predicated region
    $region14: #{tpu_custom_call.1} parent=1 // pred_check
      _
    $region15: #{tpu_custom_call.1} parent=1 // pred_check_branch
      %46 = sbr.rel (0) target = $region17
    $region16: #{tpu_custom_call.1} parent=1 // pred_region
      %47 = dma.done [#allocation6], 256
    $region17: #{tpu_custom_call.1} parent=1 // pred_fallthru
      _
    %s48 = sadd.s32 0, 0
    %s49 = smul.u32 2, %s48
    %s50 = sadd.s32 0, 0
    %s51 = smul.u32 2, %s50
    %p52 = scmp.eq.s32.totalorder 0, 0
    // Predicated region
    $region18: #{tpu_custom_call.1} parent=1 // pred_check
      %p53 = pneg %p52
    $region19: #{tpu_custom_call.1} parent=1 // pred_check_branch
      %55 = sbr.rel (%p53) target = $region21
    $region20: #{tpu_custom_call.1} parent=1 // pred_region
      %56 = vst [vmem:[#allocation7] sm:$0xff] 0.0
    $region21: #{tpu_custom_call.1} parent=1 // pred_fallthru
      _
    %v57 = vld [vmem:[#allocation5] sm:$0xff]
    %v58 = vld [vmem:[#allocation5 + $0x8] sm:$0xff]
    %v59 = vld [vmem:[#allocation2] sm:$0xff]
    %v60 = vld [vmem:[#allocation2 + $0x8] sm:$0xff]
    %v61 = vsub.f32 %v57, %v59
    %v62 = vsub.f32 %v58, %v60
    %v63 = vadd.f32 %v61, 1.0
    %v64 = vadd.f32 %v62, 1.0
    %v65 = vmax.f32 %v63, 0.0
    %v66 = vmax.f32 %v64, 0.0
    %v67 = vld [vmem:[#allocation7] sm:$0xff]
    %v68 = vadd.f32 %v65, %v66
    %v69 = vadd.f32 %v67, %v68
    %70 = vst [vmem:[#allocation7] sm:$0xff] %v69
    // Predicated region
    $region22: #{tpu_custom_call.1} parent=1 // pred_check
      _
    $region23: #{tpu_custom_call.1} parent=1 // pred_check_branch
      %72 = sbr.rel (0) target = $region25
    $region24: #{tpu_custom_call.1} parent=1 // pred_region
      %s74 = ssub.s32 128, 128
      %75 = vsyncadd [#allocation4], %s74
      %s77 = sshll.u32 [#allocation7], 4
      %s78 = int_to_ptr.vmem [resolvable:$true] %s77
      %80 = dma.vmem_to_hbm [thread:$0]  %s78, 128, %s2, [#allocation4]
    $region25: #{tpu_custom_call.1} parent=1 // pred_fallthru
      _
    // Predicated region
    $region26: #{tpu_custom_call.1} parent=1 // pred_check
      _
    $region27: #{tpu_custom_call.1} parent=1 // pred_check_branch
      %82 = sbr.rel (0) target = $region29
    $region28: #{tpu_custom_call.1} parent=1 // pred_region
      %83 = dma.done [#allocation4], 128
    $region29: #{tpu_custom_call.1} parent=1 // pred_fallthru
      _
    %84 = vsyncpa [#allocation3], 1
    %85 = vsyncpa [#allocation6], 1
    %86 = vsyncpa [#allocation4], 1

</llo_original>
